<compile_context>
chip_gen: v5e
topology: v5e:2x2
jax: 0.10.0
libtpu: 0.0.40
codegen_flags: <defaults>
</compile_context>

<pallas_src>
import functools
import math

import jax
import jax.numpy as jnp
from jax.experimental import pallas as pl
from jax.experimental.pallas import tpu as pltpu


def _round_up(x, m):
    return (x + m - 1) // m * m


def _t_embedder_kernel(t_ref, freqs_ref, w1_ref, b1_ref, w2_ref, b2_ref, o_ref,
                       *, valid_n, block_rows, mask_tail):
    # --- sinusoidal timestep embedding (VPU + EUP) -------------------------
    t = t_ref[...]                                              # (TN, 1) f32
    if mask_tail:
        # Zero padded tail rows so garbage padding can't feed NaNs through
        # cos/sin/matmul (rows are independent, but be robust anyway).
        row = (pl.program_id(0) * block_rows
               + jax.lax.broadcasted_iota(jnp.int32, t.shape, 0))
        t = jnp.where(row < valid_n, t, 0.0)
    args = t * freqs_ref[...]                                   # (TN, half)
    # DiT order: [cos | sin]; concat at a 128-lane boundary = vreg placement.
    emb = jnp.concatenate([jnp.cos(args), jnp.sin(args)], axis=-1)
    # TODO(synk): odd-`dim` zero-pad branch of timestep_embedding not needed
    #             (frequency_embedding_size=256 is even).

    # --- MLP: Linear -> SiLU -> Linear (MXU bf16 in / f32 acc) -------------
    h = (jnp.dot(emb.astype(jnp.bfloat16), w1_ref[...],
                 preferred_element_type=jnp.float32)
         + b1_ref[...])                                         # (TN, H) f32
    # SiLU with the denominator on the EUP approx-reciprocal slot.
    h = h * pl.reciprocal(1.0 + jnp.exp(-h), approx=True)
    out = (jnp.dot(h.astype(jnp.bfloat16), w2_ref[...],
                   preferred_element_type=jnp.float32)
           + b2_ref[...])
    o_ref[...] = out.astype(o_ref.dtype)


def prepare_timestep_embedder_params(w1, b1, w2, b2, *,
                                     frequency_embedding_size=256,
                                     max_period=10000):
    """One-time parameter prep (call at init, NOT per forward).

    Weights stored (in_features, out_features) so the kernel does x @ W + b.
    """
    assert frequency_embedding_size % 2 == 0, "odd freq dim not needed here"
    half = frequency_embedding_size // 2
    hidden = w2.shape[1]
    scale = -math.log(max_period) / half                 # fold the /half divide
    freqs = jnp.exp(jnp.arange(half, dtype=jnp.float32) * scale).reshape(1, half)
    return {
        "freqs": freqs,                                  # (1, half)   f32
        "w1": jnp.asarray(w1, jnp.bfloat16),             # (2*half, H) bf16
        "b1": jnp.asarray(b1, jnp.float32).reshape(1, hidden),
        "w2": jnp.asarray(w2, jnp.bfloat16),             # (H, H)      bf16
        "b2": jnp.asarray(b2, jnp.float32).reshape(1, hidden),
    }


def timestep_embedder(t, params, *, block_n=128, out_dtype=jnp.float32):
    """t: (N,) float timesteps. Returns (N, hidden) embeddings."""
    n = t.shape[0]
    freqs = params["freqs"]
    w1, b1, w2, b2 = params["w1"], params["b1"], params["w2"], params["b2"]
    half = freqs.shape[1]
    hidden = w2.shape[1]
    t2d = t.astype(jnp.float32).reshape(n, 1)

    if n <= block_n:
        # Small N (the SemTraj case): no grid, no pipeline machinery — every
        # operand lives whole in VMEM for a single kernel invocation.
        kernel = functools.partial(_t_embedder_kernel, valid_n=n,
                                   block_rows=n, mask_tail=False)
        vmem = pl.BlockSpec(memory_space=pltpu.MemorySpace.VMEM)
        return pl.pallas_call(
            kernel,
            out_shape=jax.ShapeDtypeStruct((n, hidden), out_dtype),
            in_specs=[vmem] * 6,
            out_specs=vmem,
        )(t2d, freqs, w1, b1, w2, b2)

    # Large N: row-tile the batch axis; freqs/weights stay unblocked with
    # constant index_maps (DMA'd once, held across steps by the pipeline).
    bn = min(block_n, _round_up(n, 8))
    grid = (pl.cdiv(n, bn),)
    kernel = functools.partial(_t_embedder_kernel, valid_n=n, block_rows=bn,
                               mask_tail=(n % bn != 0))

    def full_spec(shape):
        return pl.BlockSpec(shape, lambda i: (0, 0))

    return pl.pallas_call(
        kernel,
        out_shape=jax.ShapeDtypeStruct((n, hidden), out_dtype),
        grid=grid,
        in_specs=[
            pl.BlockSpec((bn, 1), lambda i: (i, 0)),     # t rows
            full_spec((1, half)),                        # freqs (hoisted)
            full_spec((2 * half, hidden)),               # W1 whole (K=256 dot)
            full_spec((1, hidden)),                      # b1
            full_spec((hidden, hidden)),                 # W2
            full_spec((1, hidden)),                      # b2
        ],
        out_specs=pl.BlockSpec((bn, hidden), lambda i: (i, 0)),
        compiler_params=pltpu.CompilerParams(
            dimension_semantics=("parallel",),           # megacore shard over N
        ),
    )(t2d, freqs, w1, b1, w2, b2)


def _reference(t, w1, b1, w2, b2, frequency_embedding_size=256,
               max_period=10000):
    """Pure-JAX reference mirroring the kernel's bf16 matmul precision."""
    half = frequency_embedding_size // 2
    i = jnp.arange(half, dtype=jnp.float32)
    freqs = jnp.exp(i * jnp.float32(-math.log(max_period) / half))
    args = t.astype(jnp.float32)[:, None] * freqs[None]
    emb = jnp.concatenate([jnp.cos(args), jnp.sin(args)], axis=-1)
    h = jnp.dot(emb.astype(jnp.bfloat16), w1.astype(jnp.bfloat16),
                preferred_element_type=jnp.float32) + b1
    h = h * jax.nn.sigmoid(h)
    return jnp.dot(h.astype(jnp.bfloat16), w2.astype(jnp.bfloat16),
                   preferred_element_type=jnp.float32) + b2


if __name__ == "__main__":
    key = jax.random.PRNGKey(0)
    k_t, k_w1, k_b1, k_w2, k_b2, k_t2 = jax.random.split(key, 6)

    FREQ = 256     # frequency_embedding_size (module default)
    HIDDEN = 128   # SemTraj default hidden_size (multiple of 128 -> lane-dense)

    # Deterministic synthetic parameters (nn.Linear shapes, stored transposed
    # as (in_features, out_features) so the kernel does x @ W + b).
    w1 = jax.random.normal(k_w1, (FREQ, HIDDEN), jnp.float32) * 0.02
    b1 = jax.random.normal(k_b1, (HIDDEN,), jnp.float32) * 0.02
    w2 = jax.random.normal(k_w2, (HIDDEN, HIDDEN), jnp.float32) * 0.02
    b2 = jax.random.normal(k_b2, (HIDDEN,), jnp.float32) * 0.02

    # One-time parameter prep (outside the hot path).
    params = prepare_timestep_embedder_params(w1, b1, w2, b2,
                                              frequency_embedding_size=FREQ)

    # --- small-N path (the SemTraj case): no grid --------------------------
    N_SMALL = 8
    t_small = jax.random.uniform(k_t, (N_SMALL,), jnp.float32, 0.0, 1000.0)
    out_small = jax.block_until_ready(timestep_embedder(t_small, params))
    ref_small = _reference(t_small, w1, b1, w2, b2, frequency_embedding_size=FREQ)
    assert out_small.shape == (N_SMALL, HIDDEN)
    assert jnp.allclose(out_small, ref_small, atol=2e-3, rtol=2e-3), \
        "mismatch vs reference (small-N path)"

    # --- large-N path: grid over row tiles with a masked tail --------------
    N_BIG = 200
    t_big = jax.random.uniform(k_t2, (N_BIG,), jnp.float32, 0.0, 1000.0)
    out_big = jax.block_until_ready(timestep_embedder(t_big, params))
    ref_big = _reference(t_big, w1, b1, w2, b2, frequency_embedding_size=FREQ)
    assert out_big.shape == (N_BIG, HIDDEN)
    assert jnp.allclose(out_big, ref_big, atol=2e-3, rtol=2e-3), \
        "mismatch vs reference (large-N path)"

    print("KERNEL_OK")
</pallas_src>

<mosaic_0001>
module attributes {stable_mosaic.version = 11 : i64} {
  func.func @_t_embedder_kernel(%arg0: memref<8x1xf32, #tpu.memory_space<vmem>>, %arg1: memref<1x128xf32, #tpu.memory_space<vmem>>, %arg2: memref<256x128xbf16, #tpu.memory_space<vmem>>, %arg3: memref<1x128xf32, #tpu.memory_space<vmem>>, %arg4: memref<128x128xbf16, #tpu.memory_space<vmem>>, %arg5: memref<1x128xf32, #tpu.memory_space<vmem>>, %arg6: memref<8x128xf32, #tpu.memory_space<vmem>>) attributes {dimension_semantics = [], scalar_prefetch = 0 : i64, scratch_operands = 0 : i64, tpu.core_type = #tpu.core_type<tc>} {
    %c0 = arith.constant 0 : index
    %c0_0 = arith.constant 0 : index
    %0 = vector.load %arg0[%c0, %c0_0] : memref<8x1xf32, #tpu.memory_space<vmem>>, vector<8x1xf32>
    %c0_1 = arith.constant 0 : index
    %c0_2 = arith.constant 0 : index
    %1 = vector.load %arg1[%c0_1, %c0_2] : memref<1x128xf32, #tpu.memory_space<vmem>>, vector<1x128xf32>
    %2 = vector.broadcast %0 : vector<8x1xf32> to vector<8x128xf32>
    %3 = vector.broadcast %1 : vector<1x128xf32> to vector<8x128xf32>
    %4 = arith.mulf %2, %3 : vector<8x128xf32>
    %5 = math.cos %4 : vector<8x128xf32>
    %6 = math.sin %4 : vector<8x128xf32>
    %7 = tpu.concatenate %5, %6 in 1 : vector<8x128xf32>, vector<8x128xf32> -> vector<8x256xf32>
    %8 = arith.truncf %7 : vector<8x256xf32> to vector<8x256xbf16>
    %c0_3 = arith.constant 0 : index
    %c0_4 = arith.constant 0 : index
    %9 = vector.load %arg2[%c0_3, %c0_4] : memref<256x128xbf16, #tpu.memory_space<vmem>>, vector<256x128xbf16>
    %cst = arith.constant dense<0.000000e+00> : vector<8x128xf32>
    %10 = tpu.matmul %8, %9, %cst {dimension_numbers = #tpu.dot_dimension_numbers<[1], [0], [0], [1], [0, 0, 1, 1], [], []>} : vector<8x256xbf16>, vector<256x128xbf16>, vector<8x128xf32> -> vector<8x128xf32>
    %c0_5 = arith.constant 0 : index
    %c0_6 = arith.constant 0 : index
    %11 = vector.load %arg3[%c0_5, %c0_6] : memref<1x128xf32, #tpu.memory_space<vmem>>, vector<1x128xf32>
    %12 = vector.broadcast %11 : vector<1x128xf32> to vector<8x128xf32>
    %13 = arith.addf %10, %12 : vector<8x128xf32>
    %cst_7 = arith.constant 0.000000e+00 : f32
    %14 = vector.broadcast %cst_7 : f32 to vector<8x128xf32>
    %15 = arith.subf %14, %13 : vector<8x128xf32>
    %16 = math.exp %15 : vector<8x128xf32>
    %cst_8 = arith.constant 1.000000e+00 : f32
    %17 = vector.broadcast %cst_8 : f32 to vector<8x128xf32>
    %18 = arith.addf %17, %16 : vector<8x128xf32>
    %19 = tpu.reciprocal %18 {approx = true} : vector<8x128xf32> -> vector<8x128xf32>
    %20 = arith.mulf %13, %19 : vector<8x128xf32>
    %21 = arith.truncf %20 : vector<8x128xf32> to vector<8x128xbf16>
    %c0_9 = arith.constant 0 : index
    %c0_10 = arith.constant 0 : index
    %22 = vector.load %arg4[%c0_9, %c0_10] : memref<128x128xbf16, #tpu.memory_space<vmem>>, vector<128x128xbf16>
    %cst_11 = arith.constant dense<0.000000e+00> : vector<8x128xf32>
    %23 = tpu.matmul %21, %22, %cst_11 {dimension_numbers = #tpu.dot_dimension_numbers<[1], [0], [0], [1], [0, 0, 1, 1], [], []>} : vector<8x128xbf16>, vector<128x128xbf16>, vector<8x128xf32> -> vector<8x128xf32>
    %c0_12 = arith.constant 0 : index
    %c0_13 = arith.constant 0 : index
    %24 = vector.load %arg5[%c0_12, %c0_13] : memref<1x128xf32, #tpu.memory_space<vmem>>, vector<1x128xf32>
    %25 = vector.broadcast %24 : vector<1x128xf32> to vector<8x128xf32>
    %26 = arith.addf %23, %25 : vector<8x128xf32>
    %c0_14 = arith.constant 0 : index
    %c0_15 = arith.constant 0 : index
    %27 = vector.load %arg6[%c0_14, %c0_15] : memref<8x128xf32, #tpu.memory_space<vmem>>, vector<8x128xf32>
    tpu.vector_store %arg6[%c0_14, %c0_15], %26 {strides = array<i32>} : memref<8x128xf32, #tpu.memory_space<vmem>>, vector<8x128xf32>,
    return
  }
}

</mosaic_0001>

<llo_original>
// kernel: tpu_custom_call.1
$region0: #{tpu_custom_call.1}
  #allocation0 [shape = 'u32[]', space=smem, size = 0x4, offset = 0x4, fixed_abs, tag = 'smem constant byte address 0x4 - core index']
  #allocation1 [shape = 'u32[72,128]{1,0:T(1,128)}', space=vmem, size = 0x9000, scoped, tag = 'internal scratch']
  %s0 = inlined_call_operand.vmem [shape: f32[8,1], index: 0, kind: input, shape index: {}]
  %s1 = inlined_call_operand.vmem [shape: f32[1,128], index: 1, kind: input, shape index: {}]
  %s2 = inlined_call_operand.hbm [shape: bf16[256,128], index: 2, kind: input, shape index: {}]
  %s3 = inlined_call_operand.vmem [shape: f32[1,128], index: 3, kind: input, shape index: {}]
  %s4 = inlined_call_operand.hbm [shape: bf16[128,128], index: 4, kind: input, shape index: {}]
  %s5 = inlined_call_operand.vmem [shape: f32[1,128], index: 5, kind: input, shape index: {}]
  %s6 = inlined_call_operand.hbm [shape: f32[8,128], index: 6, kind: output, shape index: {}]
  %s7 = sld [smem:[#allocation0]]
  $region42: #{tpu_custom_call.1} parent=0
    _
  %s9 = ssub.s32 1, %s7
  %s10 = scalar_select 0, %s9, %s7
  $region1: #{tpu_custom_call.1} parent=0
    #allocation2 [shape = 'u8[65536]{0}', space=vmem, size = 0x10000, scoped, tag = 'input window, operand 2, single buffered']
    #allocation3 [shape = 's32[1]{0}', space=sflag, size = 0x4, scoped, tag = 'scoped memory for tpu_custom_call.1']
    #allocation4 [shape = 's32[1]{0}', space=sflag, size = 0x4, scoped, tag = 'scoped memory for tpu_custom_call.1']
    #allocation5 [shape = 'u8[32768]{0}', space=vmem, size = 0x8000, scoped, tag = 'input window, operand 4, single buffered']
    #allocation6 [shape = 's32[1]{0}', space=sflag, size = 0x4, scoped, tag = 'scoped memory for tpu_custom_call.1']
    #allocation7 [shape = 'u8[4096]{0}', space=vmem, size = 0x1000, scoped, tag = 'output window, operand 0, single buffered']
    %11 = vsyncpa [#allocation3], 0
    %12 = vsyncpa [#allocation6], 0
    %13 = vsyncpa [#allocation4], 0
    // Predicated region
    $region2: #{tpu_custom_call.1} parent=1 // pred_check
      _
    $region3: #{tpu_custom_call.1} parent=1 // pred_check_branch
      %15 = sbr.rel (0) target = $region5
    $region4: #{tpu_custom_call.1} parent=1 // pred_region
      _
    $region5: #{tpu_custom_call.1} parent=1 // pred_fallthru
      _
    // Predicated region
    $region6: #{tpu_custom_call.1} parent=1 // pred_check
      _
    $region7: #{tpu_custom_call.1} parent=1 // pred_check_branch
      %17 = sbr.rel (0) target = $region9
    $region8: #{tpu_custom_call.1} parent=1 // pred_region
      _
    $region9: #{tpu_custom_call.1} parent=1 // pred_fallthru
      _
    // Predicated region
    $region10: #{tpu_custom_call.1} parent=1 // pred_check
      _
    $region11: #{tpu_custom_call.1} parent=1 // pred_check_branch
      %19 = sbr.rel (0) target = $region13
    $region12: #{tpu_custom_call.1} parent=1 // pred_region
      %21 = vsyncadd [#allocation3], 0
      %s22 = sshll.u32 %s2, 4
      %s23 = int_to_ptr.hbm [resolvable:$true] %s22
      %s24 = sshll.u32 [#allocation2], 4
      %s25 = int_to_ptr.vmem [resolvable:$true] %s24
      %30 = dma.hbm_to_vmem [thread:$0]  %s23, 2048, %s25, [#allocation3], 64, 64, 4
    $region13: #{tpu_custom_call.1} parent=1 // pred_fallthru
      _
    // Predicated region
    $region14: #{tpu_custom_call.1} parent=1 // pred_check
      _
    $region15: #{tpu_custom_call.1} parent=1 // pred_check_branch
      %32 = sbr.rel (0) target = $region17
    $region16: #{tpu_custom_call.1} parent=1 // pred_region
      _
    $region17: #{tpu_custom_call.1} parent=1 // pred_fallthru
      _
    // Predicated region
    $region18: #{tpu_custom_call.1} parent=1 // pred_check
      _
    $region19: #{tpu_custom_call.1} parent=1 // pred_check_branch
      %34 = sbr.rel (0) target = $region21
    $region20: #{tpu_custom_call.1} parent=1 // pred_region
      %36 = vsyncadd [#allocation6], 0
      %s37 = sshll.u32 %s4, 4
      %s38 = int_to_ptr.hbm [resolvable:$true] %s37
      %s39 = sshll.u32 [#allocation5], 4
      %s40 = int_to_ptr.vmem [resolvable:$true] %s39
      %45 = dma.hbm_to_vmem [thread:$0]  %s38, 1024, %s40, [#allocation6], 64, 64, 4
    $region21: #{tpu_custom_call.1} parent=1 // pred_fallthru
      _
    // Predicated region
    $region22: #{tpu_custom_call.1} parent=1 // pred_check
      _
    $region23: #{tpu_custom_call.1} parent=1 // pred_check_branch
      %47 = sbr.rel (0) target = $region25
    $region24: #{tpu_custom_call.1} parent=1 // pred_region
      _
    $region25: #{tpu_custom_call.1} parent=1 // pred_fallthru
      _
    // Predicated region
    $region26: #{tpu_custom_call.1} parent=1 // pred_check
      _
    $region27: #{tpu_custom_call.1} parent=1 // pred_check_branch
      %49 = sbr.rel (0) target = $region29
    $region28: #{tpu_custom_call.1} parent=1 // pred_region
      %51 = dma.done [#allocation3], 2048
    $region29: #{tpu_custom_call.1} parent=1 // pred_fallthru
      _
    // Predicated region
    $region30: #{tpu_custom_call.1} parent=1 // pred_check
      _
    $region31: #{tpu_custom_call.1} parent=1 // pred_check_branch
      %53 = sbr.rel (0) target = $region33
    $region32: #{tpu_custom_call.1} parent=1 // pred_region
      %55 = dma.done [#allocation6], 1024
    $region33: #{tpu_custom_call.1} parent=1 // pred_fallthru
      _
    %v56 = vld [vmem:[%s0] sm:$0xff]
    %v57 = vld [vmem:[%s1] sm:$0x1]
    %59 = vset.pattern.permute.xlu0 0
    %60 = vperm.xlu0 %59, %v56
    %v61 = vpop.permute.xlu0 %60
    %v64 = vperm.slane %v57, 0
    %v66 = vmul.f32 %v61, %v64
    %v67 = vand.u32 2147483647, %v66
    %vm68 = vcmp.le.f32.partialorder %v67, 0.7853982
    %vm69 = vcmp.lt.s32.totalorder %v66, 0
    %v70 = vand.u32 %v66, 2139095040
    %v71 = vshrl.u32 %v70, 23
    %v72 = vsub.s32 %v71, 127
    %v73 = vand.u32 2147483647, %v66
    %v74 = vand.u32 %v73, 8388607
    %v75 = vor.u32 %v74, 8388608
    %v76 = vsub.s32 0, %v75
    %v77 = vadd.s32 %v72, 1
    %vm78 = vcmp.gt.s32.totalorder %v77, 0
    %v79 = vsel %vm78, %v77, 0
    %v80 = vshrl.u32 %v79, 5
    %v81 = vand.u32 %v79, 31
    %v82 = vsub.s32 32, %v81
    %v83 = vshrl.u32 683565275, %v82
    %v84 = vshll.u32 683565275, %v81
    %v85 = vshrl.u32 2475754826, %v82
    %v86 = vor.u32 %v84, %v85
    %v87 = vshll.u32 2475754826, %v81
    %v88 = vshrl.u32 2131351028, %v82
    %v89 = vor.u32 %v87, %v88
    %v90 = vshll.u32 2131351028, %v81
    %v91 = vshrl.u32 2102212464, %v82
    %v92 = vor.u32 %v90, %v91
    %v93 = vshll.u32 2102212464, %v81
    %v94 = vshrl.u32 920167782, %v82
    %v95 = vor.u32 %v93, %v94
    %v96 = vshll.u32 920167782, %v81
    %v97 = vshrl.u32 1326507024, %v82
    %v98 = vor.u32 %v96, %v97
    %vm99 = vcmp.lt.s32.totalorder %v80, 1
    %vm100 = vcmp.lt.s32.totalorder %v80, 2
    %vm101 = vcmp.lt.s32.totalorder %v80, 3
    %vm102 = vcmp.lt.s32.totalorder %v80, 4
    %v103 = vsel %vm99, %v83, %v86
    %v104 = vsel %vm102, %v92, 2102212464
    %v105 = vsel %vm101, %v89, %v104
    %v106 = vsel %vm100, %v103, %v105
    %v107 = vsel %vm99, %v86, %v89
    %v108 = vsel %vm102, %v95, 920167782
    %v109 = vsel %vm101, %v92, %v108
    %v110 = vsel %vm100, %v107, %v109
    %v111 = vsel %vm99, %v89, %v92
    %v112 = vsel %vm102, %v98, 1326507024
    %v113 = vsel %vm101, %v95, %v112
    %v114 = vsel %vm100, %v111, %v113
    %v115 = vshll.u32 %v75, 8
    %v116 = vand.u32 %v115, 65535
    %v117 = vshrl.u32 %v115, 16
    %v118 = vand.u32 %v114, 65535
    %v119 = vshrl.u32 %v114, 16
    %v120 = vmul.u32 %v116, %v118
    %v121 = vmul.u32 %v116, %v119
    %v122 = vmul.u32 %v117, %v118
    %v123 = vmul.u32 %v117, %v119
    %v124 = vshll.u32 %v121, 16
    %v125 = vshrl.u32 %v121, 16
    %v126 = vshll.u32 %v122, 16
    %v127 = vshrl.u32 %v122, 16
    %vm128 = vc.u32 %v120, %v124
    %v129 = vsel %vm128, 1, 0
    %v130 = vadd.s32 %v120, %v124
    %v131 = vadd.s32 %v123, %v129
    %vm132 = vc.u32 %v130, %v126
    %v133 = vsel %vm132, 1, 0
    %v134 = vadd.s32 %v130, %v126
    %v135 = vadd.s32 %v131, %v133
    %v136 = vadd.s32 %v135, %v125
    %v137 = vadd.s32 %v136, %v127
    %v138 = vand.u32 %v115, 65535
    %v139 = vshrl.u32 %v115, 16
    %v140 = vand.u32 %v110, 65535
    %v141 = vshrl.u32 %v110, 16
    %v142 = vmul.u32 %v138, %v140
    %v143 = vmul.u32 %v138, %v141
    %v144 = vmul.u32 %v139, %v140
    %v145 = vmul.u32 %v139, %v141
    %v146 = vshll.u32 %v143, 16
    %v147 = vshrl.u32 %v143, 16
    %v148 = vshll.u32 %v144, 16
    %v149 = vshrl.u32 %v144, 16
    %vm150 = vc.u32 %v142, %v146
    %v151 = vsel %vm150, 1, 0
    %v152 = vadd.s32 %v142, %v146
    %v153 = vadd.s32 %v145, %v151
    %vm154 = vc.u32 %v152, %v148
    %v155 = vsel %vm154, 1, 0
    %v156 = vadd.s32 %v152, %v148
    %v157 = vadd.s32 %v153, %v155
    %v158 = vadd.s32 %v157, %v147
    %v159 = vadd.s32 %v158, %v149
    %v160 = vmul.u32 %v115, %v106
    %v161 = vadd.s32 %v137, %v156
    %vm162 = vc.u32 %v137, %v156
    %v163 = vadd.s32 %v159, 1
    %v164 = vsel %vm162, %v163, %v159
    %v165 = vadd.s32 %v160, %v164
    %v166 = vadd.s32 %v165, 536870912
    %v167 = vshrl.u32 %v166, 30
    %v168 = vshll.u32 %v167, 30
    %v169 = vsub.s32 %v165, %v168
    %vm170 = vcmp.lt.s32.totalorder %v169, 0
    %v171 = vsub.s32 0, %v169
    %v172 = vsel %vm170, %v171, %v169
    %v173 = vclz %v172
    %v174 = vsub.s32 %v173, 2
    %vm175 = vcmp.gt.s32.totalorder 0, %v174
    %v176 = vsel %vm175, 0, %v174
    %v177 = vsub.s32 32, %v176
    %v178 = vshll.u32 %v169, %v176
    %v179 = vshrl.u32 %v161, %v177
    %v180 = vor.u32 %v178, %v179
    %v181 = vsub.s32 4294967266, %v176
    %v182 = vadd.s32 %v181, 127
    %v183 = vshll.u32 %v182, 23
    %v184 = vor.u32 4788187, %v183
    %v185 = vand.u32 2147483647, %v184
    %v187 = vcvt.s32.f32 %v180
    %v188 = vmul.f32 %v187, %v185
    %v189 = vxor.u32 %v188, 2147483648
    %v190 = vsel %vm69, %v189, %v188
    %v191 = vsub.s32 4, %v167
    %v192 = vsel %vm69, %v191, %v167
    %v193 = vsel %vm68, %v66, %v190
    %v194 = vsel %vm68, 0, %v192
    %v195 = vmul.f32 %v193, %v193
    %v196 = vmul.f32 %v195, -0.001358992
    %v197 = vadd.f32 %v196, 0.041655596
    %v198 = vmul.f32 %v195, %v197
    %v199 = vadd.f32 %v198, -0.4999988
    %v200 = vmul.f32 %v195, %v199
    %v201 = vadd.f32 1.0, %v200
    %v202 = vmul.f32 %v193, %v193
    %v203 = vmul.f32 %v202, -0.00019511016
    %v204 = vadd.f32 %v203, 0.008332121
    %v205 = vmul.f32 %v202, %v204
    %v206 = vadd.f32 %v205, -0.16666654
    %v207 = vmul.f32 %v202, %v206
    %v208 = vadd.f32 %v207, 1.0
    %v209 = vmul.f32 %v208, %v193
    %vm210 = vweird.f32 %v66
    %v211 = vand.u32 %v194, 3
    %vm212 = vcmp.lt.s32.totalorder %v211, 2
    %vm213 = vcmp.eq.s32.totalorder %v211, 0
    %v214 = vxor.u32 %v209, 2147483648
    %v215 = vsel %vm213, %v201, %v214
    %vm216 = vcmp.eq.s32.totalorder %v211, 2
    %v217 = vxor.u32 %v201, 2147483648
    %v218 = vsel %vm216, %v217, %v209
    %v219 = vsel %vm212, %v215, %v218
    %v220 = vsel %vm210, nan, %v219
    %v221 = vand.u32 2147483647, %v66
    %vm222 = vcmp.le.f32.partialorder %v221, 0.7853982
    %vm223 = vcmp.lt.s32.totalorder %v66, 0
    %v224 = vand.u32 %v66, 2139095040
    %v225 = vshrl.u32 %v224, 23
    %v226 = vsub.s32 %v225, 127
    %v227 = vand.u32 2147483647, %v66
    %v228 = vand.u32 %v227, 8388607
    %v229 = vor.u32 %v228, 8388608
    %v230 = vsub.s32 0, %v229
    %v231 = vadd.s32 %v226, 1
    %vm232 = vcmp.gt.s32.totalorder %v231, 0
    %v233 = vsel %vm232, %v231, 0
    %v234 = vshrl.u32 %v233, 5
    %v235 = vand.u32 %v233, 31
    %v236 = vsub.s32 32, %v235
    %v237 = vshrl.u32 683565275, %v236
    %v238 = vshll.u32 683565275, %v235
    %v239 = vshrl.u32 2475754826, %v236
    %v240 = vor.u32 %v238, %v239
    %v241 = vshll.u32 2475754826, %v235
    %v242 = vshrl.u32 2131351028, %v236
    %v243 = vor.u32 %v241, %v242
    %v244 = vshll.u32 2131351028, %v235
    %v245 = vshrl.u32 2102212464, %v236
    %v246 = vor.u32 %v244, %v245
    %v247 = vshll.u32 2102212464, %v235
    %v248 = vshrl.u32 920167782, %v236
    %v249 = vor.u32 %v247, %v248
    %v250 = vshll.u32 920167782, %v235
    %v251 = vshrl.u32 1326507024, %v236
    %v252 = vor.u32 %v250, %v251
    %vm253 = vcmp.lt.s32.totalorder %v234, 1
    %vm254 = vcmp.lt.s32.totalorder %v234, 2
    %vm255 = vcmp.lt.s32.totalorder %v234, 3
    %vm256 = vcmp.lt.s32.totalorder %v234, 4
    %v257 = vsel %vm253, %v237, %v240
    %v258 = vsel %vm256, %v246, 2102212464
    %v259 = vsel %vm255, %v243, %v258
    %v260 = vsel %vm254, %v257, %v259
    %v261 = vsel %vm253, %v240, %v243
    %v262 = vsel %vm256, %v249, 920167782
    %v263 = vsel %vm255, %v246, %v262
    %v264 = vsel %vm254, %v261, %v263
    %v265 = vsel %vm253, %v243, %v246
    %v266 = vsel %vm256, %v252, 1326507024
    %v267 = vsel %vm255, %v249, %v266
    %v268 = vsel %vm254, %v265, %v267
    %v269 = vshll.u32 %v229, 8
    %v270 = vand.u32 %v269, 65535
    %v271 = vshrl.u32 %v269, 16
    %v272 = vand.u32 %v268, 65535
    %v273 = vshrl.u32 %v268, 16
    %v274 = vmul.u32 %v270, %v272
    %v275 = vmul.u32 %v270, %v273
    %v276 = vmul.u32 %v271, %v272
    %v277 = vmul.u32 %v271, %v273
    %v278 = vshll.u32 %v275, 16
    %v279 = vshrl.u32 %v275, 16
    %v280 = vshll.u32 %v276, 16
    %v281 = vshrl.u32 %v276, 16
    %vm282 = vc.u32 %v274, %v278
    %v283 = vsel %vm282, 1, 0
    %v284 = vadd.s32 %v274, %v278
    %v285 = vadd.s32 %v277, %v283
    %vm286 = vc.u32 %v284, %v280
    %v287 = vsel %vm286, 1, 0
    %v288 = vadd.s32 %v284, %v280
    %v289 = vadd.s32 %v285, %v287
    %v290 = vadd.s32 %v289, %v279
    %v291 = vadd.s32 %v290, %v281
    %v292 = vand.u32 %v269, 65535
    %v293 = vshrl.u32 %v269, 16
    %v294 = vand.u32 %v264, 65535
    %v295 = vshrl.u32 %v264, 16
    %v296 = vmul.u32 %v292, %v294
    %v297 = vmul.u32 %v292, %v295
    %v298 = vmul.u32 %v293, %v294
    %v299 = vmul.u32 %v293, %v295
    %v300 = vshll.u32 %v297, 16
    %v301 = vshrl.u32 %v297, 16
    %v302 = vshll.u32 %v298, 16
    %v303 = vshrl.u32 %v298, 16
    %vm304 = vc.u32 %v296, %v300
    %v305 = vsel %vm304, 1, 0
    %v306 = vadd.s32 %v296, %v300
    %v307 = vadd.s32 %v299, %v305
    %vm308 = vc.u32 %v306, %v302
    %v309 = vsel %vm308, 1, 0
    %v310 = vadd.s32 %v306, %v302
    %v311 = vadd.s32 %v307, %v309
    %v312 = vadd.s32 %v311, %v301
    %v313 = vadd.s32 %v312, %v303
    %v314 = vmul.u32 %v269, %v260
    %v315 = vadd.s32 %v291, %v310
    %vm316 = vc.u32 %v291, %v310
    %v317 = vadd.s32 %v313, 1
    %v318 = vsel %vm316, %v317, %v313
    %v319 = vadd.s32 %v314, %v318
    %v320 = vadd.s32 %v319, 536870912
    %v321 = vshrl.u32 %v320, 30
    %v322 = vshll.u32 %v321, 30
    %v323 = vsub.s32 %v319, %v322
    %vm324 = vcmp.lt.s32.totalorder %v323, 0
    %v325 = vsub.s32 0, %v323
    %v326 = vsel %vm324, %v325, %v323
    %v327 = vclz %v326
    %v328 = vsub.s32 %v327, 2
    %vm329 = vcmp.gt.s32.totalorder 0, %v328
    %v330 = vsel %vm329, 0, %v328
    %v331 = vsub.s32 32, %v330
    %v332 = vshll.u32 %v323, %v330
    %v333 = vshrl.u32 %v315, %v331
    %v334 = vor.u32 %v332, %v333
    %v335 = vsub.s32 4294967266, %v330
    %v336 = vadd.s32 %v335, 127
    %v337 = vshll.u32 %v336, 23
    %v338 = vor.u32 4788187, %v337
    %v339 = vand.u32 2147483647, %v338
    %v341 = vcvt.s32.f32 %v334
    %v342 = vmul.f32 %v341, %v339
    %v343 = vxor.u32 %v342, 2147483648
    %v344 = vsel %vm223, %v343, %v342
    %v345 = vsub.s32 4, %v321
    %v346 = vsel %vm223, %v345, %v321
    %v347 = vsel %vm222, %v66, %v344
    %v348 = vsel %vm222, 0, %v346
    %v349 = vmul.f32 %v347, %v347
    %v350 = vmul.f32 %v349, -0.001358992
    %v351 = vadd.f32 %v350, 0.041655596
    %v352 = vmul.f32 %v349, %v351
    %v353 = vadd.f32 %v352, -0.4999988
    %v354 = vmul.f32 %v349, %v353
    %v355 = vadd.f32 1.0, %v354
    %v356 = vmul.f32 %v347, %v347
    %v357 = vmul.f32 %v356, -0.00019511016
    %v358 = vadd.f32 %v357, 0.008332121
    %v359 = vmul.f32 %v356, %v358
    %v360 = vadd.f32 %v359, -0.16666654
    %v361 = vmul.f32 %v356, %v360
    %v362 = vadd.f32 %v361, 1.0
    %v363 = vmul.f32 %v362, %v347
    %vm364 = vweird.f32 %v66
    %v365 = vadd.s32 %v348, 3
    %v366 = vand.u32 %v365, 3
    %vm367 = vcmp.lt.s32.totalorder %v366, 2
    %vm368 = vcmp.eq.s32.totalorder %v366, 0
    %v369 = vxor.u32 %v363, 2147483648
    %v370 = vsel %vm368, %v355, %v369
    %vm371 = vcmp.eq.s32.totalorder %v366, 2
    %v372 = vxor.u32 %v355, 2147483648
    %v373 = vsel %vm371, %v372, %v363
    %v374 = vsel %vm367, %v370, %v373
    %v375 = vsel %vm364, nan, %v374
    %v376 = vpack.c.bf16 %v220, %v220
    %v377 = vpack.c.bf16 %v375, %v375
    %v378 = vld [vmem:[#allocation2] sm:$0xf]
    %v379 = vld [vmem:[#allocation2 + $0x4] sm:$0xf]
    %v380 = vld [vmem:[#allocation2 + $0x8] sm:$0xf]
    %v381 = vld [vmem:[#allocation2 + $0xc] sm:$0xf]
    %v382 = vld [vmem:[#allocation2 + $0x10] sm:$0xf]
    %v383 = vld [vmem:[#allocation2 + $0x14] sm:$0xf]
    %v384 = vld [vmem:[#allocation2 + $0x18] sm:$0xf]
    %v385 = vld [vmem:[#allocation2 + $0x1c] sm:$0xf]
    %v386 = vld [vmem:[#allocation2 + $0x20] sm:$0xf]
    %v387 = vld [vmem:[#allocation2 + $0x24] sm:$0xf]
    %v388 = vld [vmem:[#allocation2 + $0x28] sm:$0xf]
    %v389 = vld [vmem:[#allocation2 + $0x2c] sm:$0xf]
    %v390 = vld [vmem:[#allocation2 + $0x30] sm:$0xf]
    %v391 = vld [vmem:[#allocation2 + $0x34] sm:$0xf]
    %v392 = vld [vmem:[#allocation2 + $0x38] sm:$0xf]
    %v393 = vld [vmem:[#allocation2 + $0x3c] sm:$0xf]
    %v394 = vld [vmem:[#allocation2 + $0x40] sm:$0xf]
    %v395 = vld [vmem:[#allocation2 + $0x44] sm:$0xf]
    %v396 = vld [vmem:[#allocation2 + $0x48] sm:$0xf]
    %v397 = vld [vmem:[#allocation2 + $0x4c] sm:$0xf]
    %v398 = vld [vmem:[#allocation2 + $0x50] sm:$0xf]
    %v399 = vld [vmem:[#allocation2 + $0x54] sm:$0xf]
    %v400 = vld [vmem:[#allocation2 + $0x58] sm:$0xf]
    %v401 = vld [vmem:[#allocation2 + $0x5c] sm:$0xf]
    %v402 = vld [vmem:[#allocation2 + $0x60] sm:$0xf]
    %v403 = vld [vmem:[#allocation2 + $0x64] sm:$0xf]
    %v404 = vld [vmem:[#allocation2 + $0x68] sm:$0xf]
    %v405 = vld [vmem:[#allocation2 + $0x6c] sm:$0xf]
    %v406 = vld [vmem:[#allocation2 + $0x70] sm:$0xf]
    %v407 = vld [vmem:[#allocation2 + $0x74] sm:$0xf]
    %v408 = vld [vmem:[#allocation2 + $0x78] sm:$0xf]
    %v409 = vld [vmem:[#allocation2 + $0x7c] sm:$0xf]
    %v410 = vld [vmem:[%s3] sm:$0x1]
    %v412 = vperm.slane %v410, 0
    %v446 = vunpack.c.l.b16 %v378
    %v447 = vunpack.c.l.b16 %v379
    %v448 = vunpack.c.l.b16 %v380
    %v449 = vunpack.c.l.b16 %v381
    %v450 = vunpack.c.l.b16 %v382
    %v451 = vunpack.c.l.b16 %v383
    %v452 = vunpack.c.l.b16 %v384
    %v453 = vunpack.c.l.b16 %v385
    %v454 = vunpack.c.l.b16 %v386
    %v455 = vunpack.c.l.b16 %v387
    %v456 = vunpack.c.l.b16 %v388
    %v457 = vunpack.c.l.b16 %v389
    %v458 = vunpack.c.l.b16 %v390
    %v459 = vunpack.c.l.b16 %v391
    %v460 = vunpack.c.l.b16 %v392
    %v461 = vunpack.c.l.b16 %v393
    %v462 = vunpack.c.l.b16 %v394
    %v463 = vunpack.c.l.b16 %v395
    %v464 = vunpack.c.l.b16 %v396
    %v465 = vunpack.c.l.b16 %v397
    %v466 = vunpack.c.l.b16 %v398
    %v467 = vunpack.c.l.b16 %v399
    %v468 = vunpack.c.l.b16 %v400
    %v469 = vunpack.c.l.b16 %v401
    %v470 = vunpack.c.l.b16 %v402
    %v471 = vunpack.c.l.b16 %v403
    %v472 = vunpack.c.l.b16 %v404
    %v473 = vunpack.c.l.b16 %v405
    %v474 = vunpack.c.l.b16 %v406
    %v475 = vunpack.c.l.b16 %v407
    %v476 = vunpack.c.l.b16 %v408
    %v477 = vunpack.c.l.b16 %v409
    %v478 = vpack.c.b16 %v447, %v446
    %v479 = vpack.c.b16 %v449, %v448
    %v480 = vpack.c.b16 %v451, %v450
    %v481 = vpack.c.b16 %v453, %v452
    %v482 = vpack.c.b16 %v455, %v454
    %v483 = vpack.c.b16 %v457, %v456
    %v484 = vpack.c.b16 %v459, %v458
    %v485 = vpack.c.b16 %v461, %v460
    %v486 = vpack.c.b16 %v463, %v462
    %v487 = vpack.c.b16 %v465, %v464
    %v488 = vpack.c.b16 %v467, %v466
    %v489 = vpack.c.b16 %v469, %v468
    %v490 = vpack.c.b16 %v471, %v470
    %v491 = vpack.c.b16 %v473, %v472
    %v492 = vpack.c.b16 %v475, %v474
    %v493 = vpack.c.b16 %v477, %v476
    %510 = vmatpush.bf16.msra.mxu0 %v485
    %511 = vmatpush.bf16.msra.mxu0 %v484
    %512 = vmatpush.bf16.msra.mxu0 %v483
    %513 = vmatpush.bf16.msra.mxu0 %v482
    %514 = vmatpush.bf16.msra.mxu0 %v481
    %515 = vmatpush.bf16.msra.mxu0 %v480
    %516 = vmatpush.bf16.msra.mxu0 %v479
    %517 = vmatpush.bf16.msra.mxu0 %v478
    %518 = vmatmul.bf16.gmra.mxu0 %v376
    %v519 = vpop.f32.mrf.mxu0
    %v520 = vadd.f32 %v412, %v519
    %v521 = vpop.f32.mrf.mxu0
    %522 = vdwg.mxu0
    %523 = vmatpush.bf16.msra.mxu0 %v493
    %524 = vmatpush.bf16.msra.mxu0 %v492
    %525 = vmatpush.bf16.msra.mxu0 %v491
    %526 = vmatpush.bf16.msra.mxu0 %v490
    %527 = vmatpush.bf16.msra.mxu0 %v489
    %528 = vmatpush.bf16.msra.mxu0 %v488
    %529 = vmatpush.bf16.msra.mxu0 %v487
    %530 = vmatpush.bf16.msra.mxu0 %v486
    %531 = vmatmul.bf16.gmra.mxu0 %v377
    %v532 = vpop.f32.mrf.mxu0
    %v533 = vadd.f32 %v520, %v532
    %v534 = vpop.f32.mrf.mxu0
    %535 = vdwg.mxu0
    %v536 = vsub.f32 0.0, %v533
    %v537 = vmul.f32 %v536, 1.442695
    %v538 = vpow.pop %v537
    %v539 = vadd.f32 %v538, 1.0
    %v540 = vrcp.pop %v539
    %v541 = vmul.f32 %v533, %v540
    %v542 = vpack.c.bf16 %v541, %v541
    %v543 = vld [vmem:[#allocation5] sm:$0xf]
    %v544 = vld [vmem:[#allocation5 + $0x4] sm:$0xf]
    %v545 = vld [vmem:[#allocation5 + $0x8] sm:$0xf]
    %v546 = vld [vmem:[#allocation5 + $0xc] sm:$0xf]
    %v547 = vld [vmem:[#allocation5 + $0x10] sm:$0xf]
    %v548 = vld [vmem:[#allocation5 + $0x14] sm:$0xf]
    %v549 = vld [vmem:[#allocation5 + $0x18] sm:$0xf]
    %v550 = vld [vmem:[#allocation5 + $0x1c] sm:$0xf]
    %v551 = vld [vmem:[#allocation5 + $0x20] sm:$0xf]
    %v552 = vld [vmem:[#allocation5 + $0x24] sm:$0xf]
    %v553 = vld [vmem:[#allocation5 + $0x28] sm:$0xf]
    %v554 = vld [vmem:[#allocation5 + $0x2c] sm:$0xf]
    %v555 = vld [vmem:[#allocation5 + $0x30] sm:$0xf]
    %v556 = vld [vmem:[#allocation5 + $0x34] sm:$0xf]
    %v557 = vld [vmem:[#allocation5 + $0x38] sm:$0xf]
    %v558 = vld [vmem:[#allocation5 + $0x3c] sm:$0xf]
    %v559 = vld [vmem:[%s5] sm:$0x1]
    %v561 = vperm.slane %v559, 0
    %v579 = vunpack.c.l.b16 %v543
    %v580 = vunpack.c.l.b16 %v544
    %v581 = vunpack.c.l.b16 %v545
    %v582 = vunpack.c.l.b16 %v546
    %v583 = vunpack.c.l.b16 %v547
    %v584 = vunpack.c.l.b16 %v548
    %v585 = vunpack.c.l.b16 %v549
    %v586 = vunpack.c.l.b16 %v550
    %v587 = vunpack.c.l.b16 %v551
    %v588 = vunpack.c.l.b16 %v552
    %v589 = vunpack.c.l.b16 %v553
    %v590 = vunpack.c.l.b16 %v554
    %v591 = vunpack.c.l.b16 %v555
    %v592 = vunpack.c.l.b16 %v556
    %v593 = vunpack.c.l.b16 %v557
    %v594 = vunpack.c.l.b16 %v558
    %v595 = vpack.c.b16 %v580, %v579
    %v596 = vpack.c.b16 %v582, %v581
    %v597 = vpack.c.b16 %v584, %v583
    %v598 = vpack.c.b16 %v586, %v585
    %v599 = vpack.c.b16 %v588, %v587
    %v600 = vpack.c.b16 %v590, %v589
    %v601 = vpack.c.b16 %v592, %v591
    %v602 = vpack.c.b16 %v594, %v593
    %611 = vmatpush.bf16.msra.mxu0 %v602
    %612 = vmatpush.bf16.msra.mxu0 %v601
    %613 = vmatpush.bf16.msra.mxu0 %v600
    %614 = vmatpush.bf16.msra.mxu0 %v599
    %615 = vmatpush.bf16.msra.mxu0 %v598
    %616 = vmatpush.bf16.msra.mxu0 %v597
    %617 = vmatpush.bf16.msra.mxu0 %v596
    %618 = vmatpush.bf16.msra.mxu0 %v595
    %619 = vmatmul.bf16.gmra.mxu0 %v542
    %v620 = vpop.f32.mrf.mxu0
    %v621 = vadd.f32 %v561, %v620
    %v622 = vpop.f32.mrf.mxu0
    %623 = vdwg.mxu0
    %624 = vst [vmem:[#allocation7] sm:$0xff] %v621
    // Predicated region
    $region34: #{tpu_custom_call.1} parent=1 // pred_check
      _
    $region35: #{tpu_custom_call.1} parent=1 // pred_check_branch
      %626 = sbr.rel (0) target = $region37
    $region36: #{tpu_custom_call.1} parent=1 // pred_region
      %628 = vsyncadd [#allocation4], 0
      %s630 = sshll.u32 [#allocation7], 4
      %s631 = int_to_ptr.vmem [resolvable:$true] %s630
      %s632 = sshll.u32 %s6, 4
      %s633 = int_to_ptr.hbm [resolvable:$true] %s632
      %635 = dma.vmem_to_hbm [thread:$0]  %s631, 128, %s633, [#allocation4]
    $region37: #{tpu_custom_call.1} parent=1 // pred_fallthru
      _
    // Predicated region
    $region38: #{tpu_custom_call.1} parent=1 // pred_check
      _
    $region39: #{tpu_custom_call.1} parent=1 // pred_check_branch
      %637 = sbr.rel (0) target = $region41
    $region40: #{tpu_custom_call.1} parent=1 // pred_region
      %639 = dma.done [#allocation4], 128
    $region41: #{tpu_custom_call.1} parent=1 // pred_fallthru
      _
    %640 = vsyncpa [#allocation3], 1
    %641 = vsyncpa [#allocation6], 1
    %642 = vsyncpa [#allocation4], 1

</llo_original>
